<compile_context>
chip_gen: v5e
topology: v5e:2x2
jax: 0.10.0
libtpu: 0.0.40
codegen_flags: <defaults>
</compile_context>

<pallas_src>
import functools
import math

import jax
import jax.numpy as jnp
from jax.experimental import pallas as pl
from jax.experimental.pallas import tpu as pltpu

NB_OBS = 8         # int(np.prod(LunarLander-v2 observation_space.shape)) == 8
NB_ACTIONS = 4     # LunarLander-v2 action_space.n == 4
NB_NEURONS = 64
LANES = 128        # TPU lane width: Q output padded to a lane-dense slab
TB_DEFAULT = 1024  # batch tile (multiple of 8), fits comfortably in scoped VMEM


def _round_up(n, m):
    return ((n + m - 1) // m) * m


def _mlp_kernel(x_ref, w1_ref, b1_ref, w2_ref, b2_ref, w3_ref, b3_ref,
                q_ref, act_ref):
    """One batch tile: relu(relu(x@W1+b1)@W2+b2)@W3+b3 (+ fused argmax)."""
    x = x_ref[...].astype(jnp.bfloat16)                                 # (TB, 8)

    h1 = jnp.dot(x, w1_ref[...], preferred_element_type=jnp.float32)   # (TB, 64) f32
    h1 = jnp.maximum(h1 + b1_ref[...], 0.0)

    h2 = jnp.dot(h1.astype(jnp.bfloat16), w2_ref[...],
                 preferred_element_type=jnp.float32)                    # (TB, 64) f32
    h2 = jnp.maximum(h2 + b2_ref[...], 0.0)

    # W3/b3 are zero-padded to 128 columns -> lane-dense unmasked store.
    q = jnp.dot(h2.astype(jnp.bfloat16), w3_ref[...],
                preferred_element_type=jnp.float32) + b3_ref[...]       # (TB, 128)
    q_ref[...] = q.astype(q_ref.dtype)

    # Fused greedy action (Network.act): argmax over the 4 real columns,
    # expressed without 1-D intermediates (max + first-index-of-max).
    col = jax.lax.broadcasted_iota(jnp.int32, q.shape, 1)
    valid = col < NB_ACTIONS
    q_m = jnp.where(valid, q, -jnp.inf)
    q_max = jnp.max(q_m, axis=1, keepdims=True)                         # (TB, 1)
    idx = jnp.where((q_m == q_max) & valid, col, NB_ACTIONS)
    act_ref[...] = jnp.min(idx, axis=1, keepdims=True).astype(jnp.int32)


@functools.partial(jax.jit, static_argnames=("tb",))
def network_forward(x, params, tb=TB_DEFAULT):
    """DDQN Network forward pass.

    x: (B, NB_OBS) float32
    params: dict with w1 (8,64), b1 (1,64), w2 (64,64), b2 (1,64),
            w3 (64,4), b3 (1,4) -- all float32.
    returns: (q_values (B, NB_ACTIONS) f32, greedy actions (B,) int32)
    """
    B = x.shape[0]
    tb = min(tb, _round_up(max(B, 1), 8))     # small B -> single small tile
    b_pad = _round_up(B, tb)
    if b_pad != B:
        x = jnp.pad(x, ((0, b_pad - B), (0, 0)))

    # MXU inputs in bf16 (halves resident weight bytes); biases stay f32.
    w1 = params["w1"].astype(jnp.bfloat16)
    w2 = params["w2"].astype(jnp.bfloat16)
    w3 = jnp.pad(params["w3"],
                 ((0, 0), (0, LANES - NB_ACTIONS))).astype(jnp.bfloat16)
    b1 = params["b1"]
    b2 = params["b2"]
    b3 = jnp.pad(params["b3"], ((0, 0), (0, LANES - NB_ACTIONS)))

    grid = (b_pad // tb,)
    const2d = lambda i: (0, 0)   # weights/biases resident across batch tiles

    q_pad, act_pad = pl.pallas_call(
        _mlp_kernel,
        out_shape=(jax.ShapeDtypeStruct((b_pad, LANES), jnp.float32),
                   jax.ShapeDtypeStruct((b_pad, 1), jnp.int32)),
        grid=grid,
        in_specs=[
            pl.BlockSpec((tb, NB_OBS), lambda i: (i, 0)),          # x tile
            pl.BlockSpec((NB_OBS, NB_NEURONS), const2d),           # w1
            pl.BlockSpec((1, NB_NEURONS), const2d),                # b1
            pl.BlockSpec((NB_NEURONS, NB_NEURONS), const2d),       # w2
            pl.BlockSpec((1, NB_NEURONS), const2d),                # b2
            pl.BlockSpec((NB_NEURONS, LANES), const2d),            # w3 (padded)
            pl.BlockSpec((1, LANES), const2d),                     # b3 (padded)
        ],
        out_specs=(pl.BlockSpec((tb, LANES), lambda i: (i, 0)),    # Q slab
                   pl.BlockSpec((tb, 1), lambda i: (i, 0))),       # actions
        compiler_params=pltpu.CompilerParams(
            dimension_semantics=("parallel",)),
    )(x, w1, b1, w2, b2, w3, b3)

    return q_pad[:B, :NB_ACTIONS], act_pad[:B, 0]


def init_params(key):
    """Deterministic init mirroring torch.nn.Linear's default
    U(-1/sqrt(fan_in), 1/sqrt(fan_in)) for weights and biases."""
    def linear(key, fan_in, fan_out):
        kw, kb = jax.random.split(key)
        bound = 1.0 / math.sqrt(fan_in)
        w = jax.random.uniform(kw, (fan_in, fan_out), jnp.float32, -bound, bound)
        b = jax.random.uniform(kb, (1, fan_out), jnp.float32, -bound, bound)
        return w, b

    k1, k2, k3 = jax.random.split(key, 3)
    w1, b1 = linear(k1, NB_OBS, NB_NEURONS)
    w2, b2 = linear(k2, NB_NEURONS, NB_NEURONS)
    w3, b3 = linear(k3, NB_NEURONS, NB_ACTIONS)
    return {"w1": w1, "b1": b1, "w2": w2, "b2": b2, "w3": w3, "b3": b3}


def _reference_forward(x, p):
    h1 = jnp.maximum(x @ p["w1"] + p["b1"], 0.0)
    h2 = jnp.maximum(h1 @ p["w2"] + p["b2"], 0.0)
    return h2 @ p["w3"] + p["b3"]


if __name__ == "__main__":
    key = jax.random.PRNGKey(0)
    k_params, k_x = jax.random.split(key)
    params = init_params(k_params)

    # Rollout-sized case (Network.act path): batch = 2.
    batch = 2
    x = jax.random.normal(k_x, (batch, NB_OBS), jnp.float32)
    q_values, actions = jax.block_until_ready(network_forward(x, params))

    ref = _reference_forward(x, params)
    assert q_values.shape == (batch, NB_ACTIONS)
    assert actions.shape == (batch,)
    # bf16 MXU inputs with f32 accumulation: compare against the f32 reference
    # with a tolerance that covers bf16 input rounding.
    assert jnp.allclose(q_values, ref, atol=5e-2, rtol=5e-2)
    # Fused argmax must agree with argmax of the returned Q-values.
    assert jnp.array_equal(actions, jnp.argmax(q_values, axis=1))

    # Training/replay-sized case exercising the multi-tile batch grid + padding.
    big_b = 2048 + 100  # deliberately not a multiple of the tile
    xb = jax.random.normal(jax.random.PRNGKey(1), (big_b, NB_OBS), jnp.float32)
    qb, ab = jax.block_until_ready(network_forward(xb, params))
    refb = _reference_forward(xb, params)
    assert qb.shape == (big_b, NB_ACTIONS) and ab.shape == (big_b,)
    assert jnp.allclose(qb, refb, atol=5e-2, rtol=5e-2)
    assert jnp.array_equal(ab, jnp.argmax(qb, axis=1))

    print("KERNEL_OK")
</pallas_src>

<mosaic_0001>
module attributes {stable_mosaic.version = 11 : i64} {
  func.func @_mlp_kernel(%arg0: i32, %arg1: memref<8x8xf32, #tpu.memory_space<vmem>>, %arg2: memref<8x64xbf16, #tpu.memory_space<vmem>>, %arg3: memref<1x64xf32, #tpu.memory_space<vmem>>, %arg4: memref<64x64xbf16, #tpu.memory_space<vmem>>, %arg5: memref<1x64xf32, #tpu.memory_space<vmem>>, %arg6: memref<64x128xbf16, #tpu.memory_space<vmem>>, %arg7: memref<1x128xf32, #tpu.memory_space<vmem>>, %arg8: memref<8x128xf32, #tpu.memory_space<vmem>>, %arg9: memref<8x1xi32, #tpu.memory_space<vmem>>) attributes {dimension_semantics = [#tpu.dimension_semantics<parallel>], iteration_bounds = array<i64: 1>, scalar_prefetch = 0 : i64, scratch_operands = 0 : i64, tpu.core_type = #tpu.core_type<tc>, window_params = [{transform_indices = @transform_0, window_bounds = array<i64: 8, 8>}, {pipeline_mode = #tpu.pipeline_mode<synchronous>, transform_indices = @transform_1, window_bounds = array<i64: 8, 64>}, {pipeline_mode = #tpu.pipeline_mode<synchronous>, transform_indices = @transform_2, window_bounds = array<i64: 1, 64>}, {pipeline_mode = #tpu.pipeline_mode<synchronous>, transform_indices = @transform_3, window_bounds = array<i64: 64, 64>}, {pipeline_mode = #tpu.pipeline_mode<synchronous>, transform_indices = @transform_4, window_bounds = array<i64: 1, 64>}, {pipeline_mode = #tpu.pipeline_mode<synchronous>, transform_indices = @transform_5, window_bounds = array<i64: 64, 128>}, {pipeline_mode = #tpu.pipeline_mode<synchronous>, transform_indices = @transform_6, window_bounds = array<i64: 1, 128>}, {transform_indices = @transform_7, window_bounds = array<i64: 8, 128>}, {transform_indices = @transform_8, window_bounds = array<i64: 8, 1>}]} {
    %c0 = arith.constant 0 : index
    %c0_0 = arith.constant 0 : index
    %0 = vector.load %arg1[%c0, %c0_0] : memref<8x8xf32, #tpu.memory_space<vmem>>, vector<8x8xf32>
    %1 = arith.truncf %0 : vector<8x8xf32> to vector<8x8xbf16>
    %c0_1 = arith.constant 0 : index
    %c0_2 = arith.constant 0 : index
    %2 = vector.load %arg2[%c0_1, %c0_2] : memref<8x64xbf16, #tpu.memory_space<vmem>>, vector<8x64xbf16>
    %cst = arith.constant dense<0.000000e+00> : vector<8x64xf32>
    %3 = tpu.matmul %1, %2, %cst {dimension_numbers = #tpu.dot_dimension_numbers<[1], [0], [0], [1], [0, 0, 1, 1], [], []>} : vector<8x8xbf16>, vector<8x64xbf16>, vector<8x64xf32> -> vector<8x64xf32>
    %c0_3 = arith.constant 0 : index
    %c0_4 = arith.constant 0 : index
    %4 = vector.load %arg3[%c0_3, %c0_4] : memref<1x64xf32, #tpu.memory_space<vmem>>, vector<1x64xf32>
    %5 = vector.broadcast %4 : vector<1x64xf32> to vector<8x64xf32>
    %6 = arith.addf %3, %5 : vector<8x64xf32>
    %cst_5 = arith.constant 0.000000e+00 : f32
    %7 = vector.broadcast %cst_5 : f32 to vector<8x64xf32>
    %8 = arith.maximumf %6, %7 : vector<8x64xf32>
    %9 = arith.truncf %8 : vector<8x64xf32> to vector<8x64xbf16>
    %c0_6 = arith.constant 0 : index
    %c0_7 = arith.constant 0 : index
    %10 = vector.load %arg4[%c0_6, %c0_7] : memref<64x64xbf16, #tpu.memory_space<vmem>>, vector<64x64xbf16>
    %cst_8 = arith.constant dense<0.000000e+00> : vector<8x64xf32>
    %11 = tpu.matmul %9, %10, %cst_8 {dimension_numbers = #tpu.dot_dimension_numbers<[1], [0], [0], [1], [0, 0, 1, 1], [], []>} : vector<8x64xbf16>, vector<64x64xbf16>, vector<8x64xf32> -> vector<8x64xf32>
    %c0_9 = arith.constant 0 : index
    %c0_10 = arith.constant 0 : index
    %12 = vector.load %arg5[%c0_9, %c0_10] : memref<1x64xf32, #tpu.memory_space<vmem>>, vector<1x64xf32>
    %13 = vector.broadcast %12 : vector<1x64xf32> to vector<8x64xf32>
    %14 = arith.addf %11, %13 : vector<8x64xf32>
    %cst_11 = arith.constant 0.000000e+00 : f32
    %15 = vector.broadcast %cst_11 : f32 to vector<8x64xf32>
    %16 = arith.maximumf %14, %15 : vector<8x64xf32>
    %17 = arith.truncf %16 : vector<8x64xf32> to vector<8x64xbf16>
    %c0_12 = arith.constant 0 : index
    %c0_13 = arith.constant 0 : index
    %18 = vector.load %arg6[%c0_12, %c0_13] : memref<64x128xbf16, #tpu.memory_space<vmem>>, vector<64x128xbf16>
    %cst_14 = arith.constant dense<0.000000e+00> : vector<8x128xf32>
    %19 = tpu.matmul %17, %18, %cst_14 {dimension_numbers = #tpu.dot_dimension_numbers<[1], [0], [0], [1], [0, 0, 1, 1], [], []>} : vector<8x64xbf16>, vector<64x128xbf16>, vector<8x128xf32> -> vector<8x128xf32>
    %c0_15 = arith.constant 0 : index
    %c0_16 = arith.constant 0 : index
    %20 = vector.load %arg7[%c0_15, %c0_16] : memref<1x128xf32, #tpu.memory_space<vmem>>, vector<1x128xf32>
    %21 = vector.broadcast %20 : vector<1x128xf32> to vector<8x128xf32>
    %22 = arith.addf %19, %21 : vector<8x128xf32>
    %c0_17 = arith.constant 0 : index
    %c0_18 = arith.constant 0 : index
    %23 = vector.load %arg8[%c0_17, %c0_18] : memref<8x128xf32, #tpu.memory_space<vmem>>, vector<8x128xf32>
    tpu.vector_store %arg8[%c0_17, %c0_18], %22 {strides = array<i32>} : memref<8x128xf32, #tpu.memory_space<vmem>>, vector<8x128xf32>,
    %24 = tpu.iota {dimensions = array<i32: 1>} : vector<8x128xi32>
    %c4_i32 = arith.constant 4 : i32
    %25 = vector.broadcast %c4_i32 : i32 to vector<8x128xi32>
    %26 = arith.cmpi slt, %24, %25 : vector<8x128xi32>
    %cst_19 = arith.constant 0xFF800000 : f32
    %27 = vector.broadcast %cst_19 : f32 to vector<8x128xf32>
    %28 = arith.select %26, %22, %27 : vector<8x128xi1>, vector<8x128xf32>
    %cst_20 = arith.constant dense<0xFF800000> : vector<8xf32>
    %29 = vector.multi_reduction <maximumf>, %28, %cst_20 [1] : vector<8x128xf32> to vector<8xf32>
    %30 = vector.shape_cast %29 : vector<8xf32> to vector<8x1xf32>
    %31 = vector.broadcast %30 : vector<8x1xf32> to vector<8x128xf32>
    %32 = arith.cmpf oeq, %28, %31 : vector<8x128xf32>
    %33 = arith.andi %32, %26 : vector<8x128xi1>
    %c4_i32_21 = arith.constant 4 : i32
    %34 = vector.broadcast %c4_i32_21 : i32 to vector<8x128xi32>
    %35 = arith.select %33, %24, %34 : vector<8x128xi1>, vector<8x128xi32>
    %cst_22 = arith.constant dense<2147483647> : vector<8xi32>
    %36 = vector.multi_reduction <minsi>, %35, %cst_22 [1] : vector<8x128xi32> to vector<8xi32>
    %37 = vector.shape_cast %36 : vector<8xi32> to vector<8x1xi32>
    %c0_23 = arith.constant 0 : index
    %c0_24 = arith.constant 0 : index
    %38 = vector.load %arg9[%c0_23, %c0_24] : memref<8x1xi32, #tpu.memory_space<vmem>>, vector<8x1xi32>
    tpu.vector_store %arg9[%c0_23, %c0_24], %37 {strides = array<i32>} : memref<8x1xi32, #tpu.memory_space<vmem>>, vector<8x1xi32>,
    return
  }
  func.func @transform_0(%arg0: i32) -> (i32, i32) {
    %c0_i32 = arith.constant 0 : i32
    %c0_i32_0 = arith.constant 0 : i32
    return %arg0, %c0_i32 : i32, i32
  }
  func.func @transform_1(%arg0: i32) -> (i32, i32) {
    %c0_i32 = arith.constant 0 : i32
    %c0_i32_0 = arith.constant 0 : i32
    %c0_i32_1 = arith.constant 0 : i32
    return %c0_i32, %c0_i32_0 : i32, i32
  }
  func.func @transform_2(%arg0: i32) -> (i32, i32) {
    %c0_i32 = arith.constant 0 : i32
    %c0_i32_0 = arith.constant 0 : i32
    %c0_i32_1 = arith.constant 0 : i32
    return %c0_i32, %c0_i32_0 : i32, i32
  }
  func.func @transform_3(%arg0: i32) -> (i32, i32) {
    %c0_i32 = arith.constant 0 : i32
    %c0_i32_0 = arith.constant 0 : i32
    %c0_i32_1 = arith.constant 0 : i32
    return %c0_i32, %c0_i32_0 : i32, i32
  }
  func.func @transform_4(%arg0: i32) -> (i32, i32) {
    %c0_i32 = arith.constant 0 : i32
    %c0_i32_0 = arith.constant 0 : i32
    %c0_i32_1 = arith.constant 0 : i32
    return %c0_i32, %c0_i32_0 : i32, i32
  }
  func.func @transform_5(%arg0: i32) -> (i32, i32) {
    %c0_i32 = arith.constant 0 : i32
    %c0_i32_0 = arith.constant 0 : i32
    %c0_i32_1 = arith.constant 0 : i32
    return %c0_i32, %c0_i32_0 : i32, i32
  }
  func.func @transform_6(%arg0: i32) -> (i32, i32) {
    %c0_i32 = arith.constant 0 : i32
    %c0_i32_0 = arith.constant 0 : i32
    %c0_i32_1 = arith.constant 0 : i32
    return %c0_i32, %c0_i32_0 : i32, i32
  }
  func.func @transform_7(%arg0: i32) -> (i32, i32) {
    %c0_i32 = arith.constant 0 : i32
    %c0_i32_0 = arith.constant 0 : i32
    return %arg0, %c0_i32 : i32, i32
  }
  func.func @transform_8(%arg0: i32) -> (i32, i32) {
    %c0_i32 = arith.constant 0 : i32
    %c0_i32_0 = arith.constant 0 : i32
    return %arg0, %c0_i32 : i32, i32
  }
}

</mosaic_0001>

<llo_original>
// kernel: network_forward.1
$region0: #{network_forward.1}
  #allocation0 [shape = 'u32[]', space=smem, size = 0x4, offset = 0x4, fixed_abs, tag = 'smem constant byte address 0x4 - core index']
  #allocation1 [shape = 'u32[72,128]{1,0:T(1,128)}', space=vmem, size = 0x9000, scoped, tag = 'internal scratch']
  %s0 = inlined_call_operand.vmem [shape: f32[8,8], index: 0, kind: input, shape index: {}]
  %s1 = inlined_call_operand.vmem [shape: bf16[8,64], index: 1, kind: input, shape index: {}]
  %s2 = inlined_call_operand.vmem [shape: f32[1,64], index: 2, kind: input, shape index: {}]
  %s3 = inlined_call_operand.vmem [shape: bf16[64,64], index: 3, kind: input, shape index: {}]
  %s4 = inlined_call_operand.vmem [shape: f32[1,64], index: 4, kind: input, shape index: {}]
  %s5 = inlined_call_operand.vmem [shape: bf16[64,128], index: 5, kind: input, shape index: {}]
  %s6 = inlined_call_operand.vmem [shape: f32[1,128], index: 6, kind: input, shape index: {}]
  %s7 = inlined_call_operand.vmem [shape: f32[8,128], index: 7, kind: output, shape index: {0}]
  %s8 = inlined_call_operand.vmem [shape: s32[8,1], index: 8, kind: output, shape index: {1}]
  %9 = xla_tuple %s7, %s8
  %s10 = sld [smem:[#allocation0]]
  $region46: #{network_forward.1} parent=0
    _
  %s12 = ssub.s32 1, %s10
  %s13 = scalar_select 0, %s12, %s10
  // Predicated region
  $region2: #{network_forward.1} parent=0 // pred_check
    _
  $region3: #{network_forward.1} parent=0 // pred_check_branch
    %15 = sbr.rel (0) target = $region5
  $region4: #{network_forward.1} parent=0 // pred_region
    _
  $region5: #{network_forward.1} parent=0 // pred_fallthru
    _
  // Predicated region
  $region6: #{network_forward.1} parent=0 // pred_check
    _
  $region7: #{network_forward.1} parent=0 // pred_check_branch
    %17 = sbr.rel (0) target = $region9
  $region8: #{network_forward.1} parent=0 // pred_region
    _
  $region9: #{network_forward.1} parent=0 // pred_fallthru
    _
  // Predicated region
  $region10: #{network_forward.1} parent=0 // pred_check
    _
  $region11: #{network_forward.1} parent=0 // pred_check_branch
    %19 = sbr.rel (0) target = $region13
  $region12: #{network_forward.1} parent=0 // pred_region
    _
  $region13: #{network_forward.1} parent=0 // pred_fallthru
    _
  // Predicated region
  $region14: #{network_forward.1} parent=0 // pred_check
    _
  $region15: #{network_forward.1} parent=0 // pred_check_branch
    %21 = sbr.rel (0) target = $region17
  $region16: #{network_forward.1} parent=0 // pred_region
    _
  $region17: #{network_forward.1} parent=0 // pred_fallthru
    _
  // Predicated region
  $region18: #{network_forward.1} parent=0 // pred_check
    _
  $region19: #{network_forward.1} parent=0 // pred_check_branch
    %23 = sbr.rel (0) target = $region21
  $region20: #{network_forward.1} parent=0 // pred_region
    _
  $region21: #{network_forward.1} parent=0 // pred_fallthru
    _
  // Predicated region
  $region22: #{network_forward.1} parent=0 // pred_check
    _
  $region23: #{network_forward.1} parent=0 // pred_check_branch
    %25 = sbr.rel (0) target = $region25
  $region24: #{network_forward.1} parent=0 // pred_region
    _
  $region25: #{network_forward.1} parent=0 // pred_fallthru
    _
  // Predicated region
  $region26: #{network_forward.1} parent=0 // pred_check
    _
  $region27: #{network_forward.1} parent=0 // pred_check_branch
    %27 = sbr.rel (0) target = $region29
  $region28: #{network_forward.1} parent=0 // pred_region
    _
  $region29: #{network_forward.1} parent=0 // pred_fallthru
    _
  %v29 = vld [vmem:[%s0] sm:$0xff]
  %v30 = vpack.c.bf16 %v29, %v29
  %v31 = vld [vmem:[%s1] sm:$0xf]
  %v32 = vld [vmem:[%s2] sm:$0x1]
  %v34 = vperm.slane %v32, 0
  %vm36 = vcmask 64512
  %v38 = vsel %vm36, %v30, 0
  %vm40 = vcmask 1043456
  %v42 = vsel %vm40, %v31, 0
  %44 = vmatpush.bf16.msra.mxu0 0
  %45 = vmatpush.bf16.msra.mxu0 0
  %46 = vmatpush.bf16.msra.mxu0 0
  %47 = vmatpush.bf16.msra.mxu0 0
  %48 = vmatpush.bf16.msra.mxu0 0
  %49 = vmatpush.bf16.msra.mxu0 0
  %50 = vmatpush.bf16.msra.mxu0 0
  %51 = vmatpush.bf16.msra.mxu0 %v42
  %52 = vmatmul.bf16.gmra.mxu0 %v38
  %v53 = vpop.f32.mrf.mxu0
  %v54 = vadd.f32 %v34, %v53
  %v55 = vpop.f32.mrf.mxu0
  %56 = vdwg.mxu0
  %v57 = vmax.f32 %v54, 0.0
  %v58 = vpack.c.bf16 %v57, %v57
  %v59 = vld [vmem:[%s3] sm:$0xf]
  %v60 = vld [vmem:[%s3 + $0x4] sm:$0xf]
  %v61 = vld [vmem:[%s3 + $0x8] sm:$0xf]
  %v62 = vld [vmem:[%s3 + $0xc] sm:$0xf]
  %v63 = vld [vmem:[%s3 + $0x10] sm:$0xf]
  %v64 = vld [vmem:[%s3 + $0x14] sm:$0xf]
  %v65 = vld [vmem:[%s3 + $0x18] sm:$0xf]
  %v66 = vld [vmem:[%s3 + $0x1c] sm:$0xf]
  %v67 = vld [vmem:[%s4] sm:$0x1]
  %v69 = vperm.slane %v67, 0
  %v79 = vunpack.c.l.b16 %v59
  %v80 = vunpack.c.l.b16 %v60
  %v81 = vunpack.c.l.b16 %v61
  %v82 = vunpack.c.l.b16 %v62
  %v83 = vunpack.c.l.b16 %v63
  %v84 = vunpack.c.l.b16 %v64
  %v85 = vunpack.c.l.b16 %v65
  %v86 = vunpack.c.l.b16 %v66
  %v87 = vpack.c.b16 %v80, %v79
  %v88 = vpack.c.b16 %v82, %v81
  %v89 = vpack.c.b16 %v84, %v83
  %v90 = vpack.c.b16 %v86, %v85
  %vm95 = vcmask 523264
  %v97 = vsel %vm95, %v58, 0
  %99 = vmatpush.bf16.msra.mxu0 0
  %100 = vmatpush.bf16.msra.mxu0 0
  %101 = vmatpush.bf16.msra.mxu0 0
  %102 = vmatpush.bf16.msra.mxu0 0
  %103 = vmatpush.bf16.msra.mxu0 %v90
  %104 = vmatpush.bf16.msra.mxu0 %v89
  %105 = vmatpush.bf16.msra.mxu0 %v88
  %106 = vmatpush.bf16.msra.mxu0 %v87
  %107 = vmatmul.bf16.gmra.mxu0 %v97
  %v108 = vpop.f32.mrf.mxu0
  %v109 = vadd.f32 %v69, %v108
  %v110 = vpop.f32.mrf.mxu0
  %111 = vdwg.mxu0
  %v112 = vmax.f32 %v109, 0.0
  %v113 = vpack.c.bf16 %v112, %v112
  %v114 = vld [vmem:[%s5] sm:$0xf]
  %v115 = vld [vmem:[%s5 + $0x4] sm:$0xf]
  %v116 = vld [vmem:[%s5 + $0x8] sm:$0xf]
  %v117 = vld [vmem:[%s5 + $0xc] sm:$0xf]
  %v118 = vld [vmem:[%s5 + $0x10] sm:$0xf]
  %v119 = vld [vmem:[%s5 + $0x14] sm:$0xf]
  %v120 = vld [vmem:[%s5 + $0x18] sm:$0xf]
  %v121 = vld [vmem:[%s5 + $0x1c] sm:$0xf]
  %v122 = vld [vmem:[%s6] sm:$0x1]
  %v124 = vperm.slane %v122, 0
  %v134 = vunpack.c.l.b16 %v114
  %v135 = vunpack.c.l.b16 %v115
  %v136 = vunpack.c.l.b16 %v116
  %v137 = vunpack.c.l.b16 %v117
  %v138 = vunpack.c.l.b16 %v118
  %v139 = vunpack.c.l.b16 %v119
  %v140 = vunpack.c.l.b16 %v120
  %v141 = vunpack.c.l.b16 %v121
  %v142 = vpack.c.b16 %v135, %v134
  %v143 = vpack.c.b16 %v137, %v136
  %v144 = vpack.c.b16 %v139, %v138
  %v145 = vpack.c.b16 %v141, %v140
  %v151 = vsel %vm95, %v113, 0
  %153 = vmatpush.bf16.msra.mxu0 0
  %154 = vmatpush.bf16.msra.mxu0 0
  %155 = vmatpush.bf16.msra.mxu0 0
  %156 = vmatpush.bf16.msra.mxu0 0
  %157 = vmatpush.bf16.msra.mxu0 %v145
  %158 = vmatpush.bf16.msra.mxu0 %v144
  %159 = vmatpush.bf16.msra.mxu0 %v143
  %160 = vmatpush.bf16.msra.mxu0 %v142
  %161 = vmatmul.bf16.gmra.mxu0 %v151
  %v162 = vpop.f32.mrf.mxu0
  %v163 = vadd.f32 %v124, %v162
  %v164 = vpop.f32.mrf.mxu0
  %165 = vdwg.mxu0
  %166 = vst [vmem:[%s7] sm:$0xff] %v163
  %v167 = vlaneseq
  %v168 = vand.u32 %v167, 127
  %vm169 = vcmp.lt.s32.totalorder %v168, 4
  %v170 = vsel %vm169, %v163, -inf
  %171 = vmax.xlane.f32.xlu0 %v170
  %v172 = vpop.xlane.xlu0 %171
  %vm173 = vcmp.eq.f32.partialorder %v170, %v172
  %vm174 = vmand %vm173, %vm169
  %v175 = vsel %vm174, %v168, 4
  %v176 = vand.u32 %v175, 65535
  %v177 = vshra.s32 %v175, 16
  %v178 = vcvt.s32.f32 %v176
  %v179 = vcvt.s32.f32 %v177
  %180 = vmin.xlane.f32.xlu0 %v179
  %v181 = vpop.xlane.xlu0 %180
  %vm182 = vcmp.eq.f32.partialorder %v179, %v181
  %v183 = vsel %vm182, %v178, inf
  %184 = vmin.xlane.f32.xlu0 %v183
  %v185 = vpop.xlane.xlu0 %184
  %v186 = vcvt.f32.s32 %v185
  %v187 = vcvt.f32.s32 %v181
  %v188 = vshll.u32 %v187, 16
  %v189 = vadd.s32 %v188, %v186
  %vm190 = vcmask 7168
  %191 = vst.msk [vmem:[%s8] sm:$0xff] %vm190, %v189
  // Predicated region
  $region30: #{network_forward.1} parent=0 // pred_check
    _
  $region31: #{network_forward.1} parent=0 // pred_check_branch
    %193 = sbr.rel (0) target = $region33
  $region32: #{network_forward.1} parent=0 // pred_region
    _
  $region33: #{network_forward.1} parent=0 // pred_fallthru
    _
  // Predicated region
  $region34: #{network_forward.1} parent=0 // pred_check
    _
  $region35: #{network_forward.1} parent=0 // pred_check_branch
    %195 = sbr.rel (0) target = $region37
  $region36: #{network_forward.1} parent=0 // pred_region
    _
  $region37: #{network_forward.1} parent=0 // pred_fallthru
    _
  // Predicated region
  $region38: #{network_forward.1} parent=0 // pred_check
    _
  $region39: #{network_forward.1} parent=0 // pred_check_branch
    %197 = sbr.rel (0) target = $region41
  $region40: #{network_forward.1} parent=0 // pred_region
    _
  $region41: #{network_forward.1} parent=0 // pred_fallthru
    _
  // Predicated region
  $region42: #{network_forward.1} parent=0 // pred_check
    _
  $region43: #{network_forward.1} parent=0 // pred_check_branch
    %199 = sbr.rel (0) target = $region45
  $region44: #{network_forward.1} parent=0 // pred_region
    _
  $region45: #{network_forward.1} parent=0 // pred_fallthru
    _

</llo_original>
